<compile_context>
chip_gen: v6e
topology: v6e:2x2x1
jax: 0.10.0
libtpu: 0.0.40
codegen_flags: <defaults>
</compile_context>

<pallas_src>
import functools

import jax
import jax.numpy as jnp
from jax.experimental import pallas as pl
from jax.experimental.pallas import tpu as pltpu


def _decoder_kernel(num_extra_layers, *refs):
    """Fused MLP decoder: matmul + bias + relu, optional extra linears, matmul
    + bias + sigmoid. All refs are VMEM tiles.

    refs layout: x, w1, b1, [we_i, be_i]*num_extra_layers, w2, b2, out
    """
    x_ref, w1_ref, b1_ref = refs[0], refs[1], refs[2]
    extra_refs = refs[3:3 + 2 * num_extra_layers]
    w2_ref, b2_ref, o_ref = refs[-3], refs[-2], refs[-1]

    # Hidden layer: relu(x @ W1 + b1) — bf16 operands, f32 MXU accumulation,
    # bias/relu on the VPU in f32.
    h = jnp.dot(x_ref[...], w1_ref[...], preferred_element_type=jnp.float32)
    h = jnp.maximum(h + b1_ref[...], 0.0)

    # Extra linear layers (no activation, matching the PyTorch forward).
    for i in range(num_extra_layers):
        we_ref = extra_refs[2 * i]
        be_ref = extra_refs[2 * i + 1]
        h = jnp.dot(h.astype(we_ref.dtype), we_ref[...],
                    preferred_element_type=jnp.float32) + be_ref[...]

    # Output layer: sigmoid(h @ W2 + b2).  exp and the approximate reciprocal
    # both run on the EUP slot, keeping the VALU free for the bias add.
    logits = jnp.dot(h.astype(w2_ref.dtype), w2_ref[...],
                     preferred_element_type=jnp.float32) + b2_ref[...]
    o_ref[...] = pl.reciprocal(1.0 + jnp.exp(-logits), approx=True)


def _round_up(x, m):
    return ((x + m - 1) // m) * m


def decoder_forward(x, w1, b1, extras, w2, b2, *, tile_b=256):
    """Runs the fused decoder kernel, tiling over the batch dimension.

    tile_b guidance: 128 on v5e, 256(+) on v6e/v7x; keep >=2 grid steps on v7x
    so both TensorCores get work.  The effective tile is clamped to the (8-row
    aligned) batch so tiny batches don't pay for padding compute.
    """
    B, n_latent = x.shape
    inter = w1.shape[1]
    out_dim = w2.shape[1]
    num_extra = len(extras)

    # Effective batch tile: multiple of 8 (sublane), no larger than the batch.
    tile = max(8, min(tile_b, _round_up(B, 8)))
    B_pad = _round_up(B, tile)
    if B_pad != B:
        x = jnp.pad(x, ((0, B_pad - B), (0, 0)))

    # bf16 operands for the MXU; biases stay f32 (added post-accumulation).
    x_bf = x.astype(jnp.bfloat16)
    w1_bf = w1.astype(jnp.bfloat16)
    w2_bf = w2.astype(jnp.bfloat16)

    in_arrays = [x_bf, w1_bf, b1.reshape(1, inter).astype(jnp.float32)]
    in_specs = [
        pl.BlockSpec((tile, n_latent), lambda i: (i, 0)),
        pl.BlockSpec((n_latent, inter), lambda i: (0, 0)),
        pl.BlockSpec((1, inter), lambda i: (0, 0)),
    ]
    for we, be in extras:
        in_arrays += [we.astype(jnp.bfloat16),
                      be.reshape(1, inter).astype(jnp.float32)]
        in_specs += [
            pl.BlockSpec((inter, inter), lambda i: (0, 0)),
            pl.BlockSpec((1, inter), lambda i: (0, 0)),
        ]
    in_arrays += [w2_bf, b2.reshape(1, out_dim).astype(jnp.float32)]
    in_specs += [
        pl.BlockSpec((inter, out_dim), lambda i: (0, 0)),
        pl.BlockSpec((1, out_dim), lambda i: (0, 0)),
    ]

    kernel = functools.partial(_decoder_kernel, num_extra)

    # NOTE: weights/biases use constant index maps, so they stay VMEM-resident
    # across the batch grid.  At production widths (inter ~ 4096) consider
    # pipeline_mode=pl.Buffered(1) on those specs plus a vmem_limit_bytes bump
    # to stay under v7x's 64 MiB; unnecessary at these sizes.
    out = pl.pallas_call(
        kernel,
        out_shape=jax.ShapeDtypeStruct((B_pad, out_dim), jnp.float32),
        grid=(pl.cdiv(B_pad, tile),),
        in_specs=in_specs,
        out_specs=pl.BlockSpec((tile, out_dim), lambda i: (i, 0)),
        compiler_params=pltpu.CompilerParams(
            dimension_semantics=("parallel",)),
    )(*in_arrays)

    return out[:B] if B_pad != B else out


def _init_linear(key, fan_in, fan_out):
    """Deterministic init mimicking nn.Linear: U(-1/sqrt(fan_in), 1/sqrt(fan_in)).
    Weight is returned already transposed to [in, out]."""
    kw, kb = jax.random.split(key)
    bound = 1.0 / jnp.sqrt(float(fan_in))
    w = jax.random.uniform(kw, (fan_in, fan_out), jnp.float32, -bound, bound)
    b = jax.random.uniform(kb, (fan_out,), jnp.float32, -bound, bound)
    return w, b


def _reference(x, w1, b1, extras, w2, b2):
    h = jnp.maximum(x @ w1 + b1, 0.0)
    for we, be in extras:
        h = h @ we + be
    return jax.nn.sigmoid(h @ w2 + b2)


if __name__ == "__main__":
    # Small shapes consistent with the module: n_latent_dims=8,
    # intermediate_size=128, output_size=256, num_extra_layers=1, bayesian=False.
    # TODO(synk): bayesian=True path (LinearReparameterization) not implemented.
    B, n_latent, inter, out_dim = 8, 8, 128, 256
    num_extra_layers = 1

    key = jax.random.PRNGKey(0)
    k_x, k_l1, k_l2, *k_extra = jax.random.split(key, 3 + num_extra_layers)

    x = jax.random.normal(k_x, (B, n_latent), jnp.float32)
    w1, b1 = _init_linear(k_l1, n_latent, inter)
    extras = [_init_linear(k, inter, inter) for k in k_extra]
    w2, b2 = _init_linear(k_l2, inter, out_dim)

    out = decoder_forward(x, w1, b1, extras, w2, b2)
    out = jax.block_until_ready(out)

    ref = _reference(x, w1, b1, extras, w2, b2)
    assert out.shape == (B, out_dim), out.shape
    # bf16 MXU operands + approx reciprocal -> loosen tolerance vs f32 reference.
    assert jnp.allclose(out, ref, atol=3e-2, rtol=3e-2), float(
        jnp.max(jnp.abs(out - ref)))

    print("KERNEL_OK")
</pallas_src>

<mosaic_0001>
module attributes {stable_mosaic.version = 11 : i64} {
  func.func @_decoder_kernel(%arg0: i32, %arg1: memref<8x8xbf16, #tpu.memory_space<vmem>>, %arg2: memref<8x128xbf16, #tpu.memory_space<vmem>>, %arg3: memref<1x128xf32, #tpu.memory_space<vmem>>, %arg4: memref<128x128xbf16, #tpu.memory_space<vmem>>, %arg5: memref<1x128xf32, #tpu.memory_space<vmem>>, %arg6: memref<128x256xbf16, #tpu.memory_space<vmem>>, %arg7: memref<1x256xf32, #tpu.memory_space<vmem>>, %arg8: memref<8x256xf32, #tpu.memory_space<vmem>>) attributes {dimension_semantics = [#tpu.dimension_semantics<parallel>], iteration_bounds = array<i64: 1>, scalar_prefetch = 0 : i64, scratch_operands = 0 : i64, tpu.core_type = #tpu.core_type<tc>, window_params = [{transform_indices = @transform_0, window_bounds = array<i64: 8, 8>}, {pipeline_mode = #tpu.pipeline_mode<synchronous>, transform_indices = @transform_1, window_bounds = array<i64: 8, 128>}, {pipeline_mode = #tpu.pipeline_mode<synchronous>, transform_indices = @transform_2, window_bounds = array<i64: 1, 128>}, {pipeline_mode = #tpu.pipeline_mode<synchronous>, transform_indices = @transform_3, window_bounds = array<i64: 128, 128>}, {pipeline_mode = #tpu.pipeline_mode<synchronous>, transform_indices = @transform_4, window_bounds = array<i64: 1, 128>}, {pipeline_mode = #tpu.pipeline_mode<synchronous>, transform_indices = @transform_5, window_bounds = array<i64: 128, 256>}, {pipeline_mode = #tpu.pipeline_mode<synchronous>, transform_indices = @transform_6, window_bounds = array<i64: 1, 256>}, {transform_indices = @transform_7, window_bounds = array<i64: 8, 256>}]} {
    %c0 = arith.constant 0 : index
    %c0_0 = arith.constant 0 : index
    %0 = vector.load %arg1[%c0, %c0_0] : memref<8x8xbf16, #tpu.memory_space<vmem>>, vector<8x8xbf16>
    %c0_1 = arith.constant 0 : index
    %c0_2 = arith.constant 0 : index
    %1 = vector.load %arg2[%c0_1, %c0_2] : memref<8x128xbf16, #tpu.memory_space<vmem>>, vector<8x128xbf16>
    %cst = arith.constant dense<0.000000e+00> : vector<8x128xf32>
    %2 = tpu.matmul %0, %1, %cst {dimension_numbers = #tpu.dot_dimension_numbers<[1], [0], [0], [1], [0, 0, 1, 1], [], []>} : vector<8x8xbf16>, vector<8x128xbf16>, vector<8x128xf32> -> vector<8x128xf32>
    %c0_3 = arith.constant 0 : index
    %c0_4 = arith.constant 0 : index
    %3 = vector.load %arg3[%c0_3, %c0_4] : memref<1x128xf32, #tpu.memory_space<vmem>>, vector<1x128xf32>
    %4 = vector.broadcast %3 : vector<1x128xf32> to vector<8x128xf32>
    %5 = arith.addf %2, %4 : vector<8x128xf32>
    %cst_5 = arith.constant 0.000000e+00 : f32
    %6 = vector.broadcast %cst_5 : f32 to vector<8x128xf32>
    %7 = arith.maximumf %5, %6 : vector<8x128xf32>
    %8 = arith.truncf %7 : vector<8x128xf32> to vector<8x128xbf16>
    %c0_6 = arith.constant 0 : index
    %c0_7 = arith.constant 0 : index
    %9 = vector.load %arg4[%c0_6, %c0_7] : memref<128x128xbf16, #tpu.memory_space<vmem>>, vector<128x128xbf16>
    %cst_8 = arith.constant dense<0.000000e+00> : vector<8x128xf32>
    %10 = tpu.matmul %8, %9, %cst_8 {dimension_numbers = #tpu.dot_dimension_numbers<[1], [0], [0], [1], [0, 0, 1, 1], [], []>} : vector<8x128xbf16>, vector<128x128xbf16>, vector<8x128xf32> -> vector<8x128xf32>
    %c0_9 = arith.constant 0 : index
    %c0_10 = arith.constant 0 : index
    %11 = vector.load %arg5[%c0_9, %c0_10] : memref<1x128xf32, #tpu.memory_space<vmem>>, vector<1x128xf32>
    %12 = vector.broadcast %11 : vector<1x128xf32> to vector<8x128xf32>
    %13 = arith.addf %10, %12 : vector<8x128xf32>
    %14 = arith.truncf %13 : vector<8x128xf32> to vector<8x128xbf16>
    %c0_11 = arith.constant 0 : index
    %c0_12 = arith.constant 0 : index
    %15 = vector.load %arg6[%c0_11, %c0_12] : memref<128x256xbf16, #tpu.memory_space<vmem>>, vector<128x256xbf16>
    %cst_13 = arith.constant dense<0.000000e+00> : vector<8x256xf32>
    %16 = tpu.matmul %14, %15, %cst_13 {dimension_numbers = #tpu.dot_dimension_numbers<[1], [0], [0], [1], [0, 0, 1, 1], [], []>} : vector<8x128xbf16>, vector<128x256xbf16>, vector<8x256xf32> -> vector<8x256xf32>
    %c0_14 = arith.constant 0 : index
    %c0_15 = arith.constant 0 : index
    %17 = vector.load %arg7[%c0_14, %c0_15] : memref<1x256xf32, #tpu.memory_space<vmem>>, vector<1x256xf32>
    %18 = vector.broadcast %17 : vector<1x256xf32> to vector<8x256xf32>
    %19 = arith.addf %16, %18 : vector<8x256xf32>
    %cst_16 = arith.constant 0.000000e+00 : f32
    %20 = vector.broadcast %cst_16 : f32 to vector<8x256xf32>
    %21 = arith.subf %20, %19 : vector<8x256xf32>
    %22 = math.exp %21 : vector<8x256xf32>
    %cst_17 = arith.constant 1.000000e+00 : f32
    %23 = vector.broadcast %cst_17 : f32 to vector<8x256xf32>
    %24 = arith.addf %23, %22 : vector<8x256xf32>
    %25 = tpu.reciprocal %24 {approx = true} : vector<8x256xf32> -> vector<8x256xf32>
    %c0_18 = arith.constant 0 : index
    %c0_19 = arith.constant 0 : index
    %26 = vector.load %arg8[%c0_18, %c0_19] : memref<8x256xf32, #tpu.memory_space<vmem>>, vector<8x256xf32>
    tpu.vector_store %arg8[%c0_18, %c0_19], %25 {strides = array<i32>} : memref<8x256xf32, #tpu.memory_space<vmem>>, vector<8x256xf32>,
    return
  }
  func.func @transform_0(%arg0: i32) -> (i32, i32) {
    %c0_i32 = arith.constant 0 : i32
    %c0_i32_0 = arith.constant 0 : i32
    return %arg0, %c0_i32 : i32, i32
  }
  func.func @transform_1(%arg0: i32) -> (i32, i32) {
    %c0_i32 = arith.constant 0 : i32
    %c0_i32_0 = arith.constant 0 : i32
    %c0_i32_1 = arith.constant 0 : i32
    return %c0_i32, %c0_i32_0 : i32, i32
  }
  func.func @transform_2(%arg0: i32) -> (i32, i32) {
    %c0_i32 = arith.constant 0 : i32
    %c0_i32_0 = arith.constant 0 : i32
    %c0_i32_1 = arith.constant 0 : i32
    return %c0_i32, %c0_i32_0 : i32, i32
  }
  func.func @transform_3(%arg0: i32) -> (i32, i32) {
    %c0_i32 = arith.constant 0 : i32
    %c0_i32_0 = arith.constant 0 : i32
    %c0_i32_1 = arith.constant 0 : i32
    return %c0_i32, %c0_i32_0 : i32, i32
  }
  func.func @transform_4(%arg0: i32) -> (i32, i32) {
    %c0_i32 = arith.constant 0 : i32
    %c0_i32_0 = arith.constant 0 : i32
    %c0_i32_1 = arith.constant 0 : i32
    return %c0_i32, %c0_i32_0 : i32, i32
  }
  func.func @transform_5(%arg0: i32) -> (i32, i32) {
    %c0_i32 = arith.constant 0 : i32
    %c0_i32_0 = arith.constant 0 : i32
    %c0_i32_1 = arith.constant 0 : i32
    return %c0_i32, %c0_i32_0 : i32, i32
  }
  func.func @transform_6(%arg0: i32) -> (i32, i32) {
    %c0_i32 = arith.constant 0 : i32
    %c0_i32_0 = arith.constant 0 : i32
    %c0_i32_1 = arith.constant 0 : i32
    return %c0_i32, %c0_i32_0 : i32, i32
  }
  func.func @transform_7(%arg0: i32) -> (i32, i32) {
    %c0_i32 = arith.constant 0 : i32
    %c0_i32_0 = arith.constant 0 : i32
    return %arg0, %c0_i32 : i32, i32
  }
}

</mosaic_0001>

<llo_original>
// kernel: tpu_custom_call.1
$region0: #{tpu_custom_call.1}
  #allocation0 [shape = 'u32[]', space=smem, size = 0x4, offset = 0x4, fixed_abs, tag = 'smem constant byte address 0x4 - core index']
  #allocation1 [shape = 'u32[144,128]{1,0:T(1,128)}', space=vmem, size = 0x12000, scoped, tag = 'internal scratch']
  %s0 = inlined_call_operand.hbm [shape: bf16[8,8], index: 0, kind: input, shape index: {}]
  %s1 = inlined_call_operand.hbm [shape: bf16[8,128], index: 1, kind: input, shape index: {}]
  %s2 = inlined_call_operand.vmem [shape: f32[1,128], index: 2, kind: input, shape index: {}]
  %s3 = inlined_call_operand.hbm [shape: bf16[128,128], index: 3, kind: input, shape index: {}]
  %s4 = inlined_call_operand.vmem [shape: f32[1,128], index: 4, kind: input, shape index: {}]
  %s5 = inlined_call_operand.hbm [shape: bf16[128,256], index: 5, kind: input, shape index: {}]
  %s6 = inlined_call_operand.vmem [shape: f32[1,256], index: 6, kind: input, shape index: {}]
  %s7 = inlined_call_operand.hbm [shape: f32[8,256], index: 7, kind: output, shape index: {}]
  %s8 = sld [smem:[#allocation0]]
  $region54: #{tpu_custom_call.1} parent=0
    _
  %s10 = ssub.s32 1, %s8
  %s11 = scalar_select 0, %s10, %s8
  $region1: #{tpu_custom_call.1} parent=0
    #allocation2 [shape = 'u8[2048]{0}', space=vmem, size = 0x800, scoped, tag = 'input window, operand 0, single buffered']
    #allocation3 [shape = 's32[1]{0}', space=sflag, size = 0x4, scoped, tag = 'scoped memory for tpu_custom_call.1']
    #allocation4 [shape = 's32[1]{0}', space=sflag, size = 0x4, scoped, tag = 'scoped memory for tpu_custom_call.1']
    #allocation5 [shape = 'u8[2048]{0}', space=vmem, size = 0x800, scoped, tag = 'input window, operand 1, single buffered']
    #allocation6 [shape = 's32[1]{0}', space=sflag, size = 0x4, scoped, tag = 'scoped memory for tpu_custom_call.1']
    #allocation7 [shape = 'u8[32768]{0}', space=vmem, size = 0x8000, scoped, tag = 'input window, operand 3, single buffered']
    #allocation8 [shape = 'u8[65536]{0}', space=vmem, size = 0x10000, scoped, tag = 'input window, operand 5, single buffered']
    #allocation9 [shape = 's32[1]{0}', space=sflag, size = 0x4, scoped, tag = 'scoped memory for tpu_custom_call.1']
    #allocation10 [shape = 'u8[8192]{0}', space=vmem, size = 0x2000, scoped, tag = 'output window, operand 0, single buffered']
    %12 = vsyncpa [#allocation3], 0
    %13 = vsyncpa [#allocation6], 0
    %14 = vsyncpa [#allocation9], 0
    %15 = vsyncpa [#allocation4], 0
    // Predicated region
    $region2: #{tpu_custom_call.1} parent=1 // pred_check
      _
    $region3: #{tpu_custom_call.1} parent=1 // pred_check_branch
      %17 = sbr.rel (0) target = $region5
    $region4: #{tpu_custom_call.1} parent=1 // pred_region
      %s19 = ssub.s32 64, 64
      %20 = vsyncadd [#allocation3], %s19
      %s22 = sshll.u32 [#allocation2], 4
      %s23 = int_to_ptr.vmem [resolvable:$true] %s22
      %25 = dma.hbm_to_vmem [thread:$0]  %s0, 64, %s23, [#allocation3]
    $region5: #{tpu_custom_call.1} parent=1 // pred_fallthru
      _
    // Predicated region
    $region6: #{tpu_custom_call.1} parent=1 // pred_check
      _
    $region7: #{tpu_custom_call.1} parent=1 // pred_check_branch
      %27 = sbr.rel (0) target = $region9
    $region8: #{tpu_custom_call.1} parent=1 // pred_region
      %s29 = ssub.s32 64, 64
      %30 = vsyncadd [#allocation6], %s29
      %s32 = sshll.u32 [#allocation5], 4
      %s33 = int_to_ptr.vmem [resolvable:$true] %s32
      %35 = dma.hbm_to_vmem [thread:$0]  %s1, 64, %s33, [#allocation6]
    $region9: #{tpu_custom_call.1} parent=1 // pred_fallthru
      _
    // Predicated region
    $region10: #{tpu_custom_call.1} parent=1 // pred_check
      _
    $region11: #{tpu_custom_call.1} parent=1 // pred_check_branch
      %37 = sbr.rel (0) target = $region13
    $region12: #{tpu_custom_call.1} parent=1 // pred_region
      _
    $region13: #{tpu_custom_call.1} parent=1 // pred_fallthru
      _
    // Predicated region
    $region14: #{tpu_custom_call.1} parent=1 // pred_check
      _
    $region15: #{tpu_custom_call.1} parent=1 // pred_check_branch
      %39 = sbr.rel (0) target = $region17
    $region16: #{tpu_custom_call.1} parent=1 // pred_region
      %s41 = ssub.s32 1024, 1024
      %42 = vsyncadd [#allocation6], %s41
      %s43 = sshll.u32 [#allocation7], 4
      %s44 = int_to_ptr.vmem [resolvable:$true] %s43
      %49 = dma.hbm_to_vmem [thread:$0]  %s3, 1024, %s44, [#allocation6], 64, 64, 4
    $region17: #{tpu_custom_call.1} parent=1 // pred_fallthru
      _
    // Predicated region
    $region18: #{tpu_custom_call.1} parent=1 // pred_check
      _
    $region19: #{tpu_custom_call.1} parent=1 // pred_check_branch
      %51 = sbr.rel (0) target = $region21
    $region20: #{tpu_custom_call.1} parent=1 // pred_region
      _
    $region21: #{tpu_custom_call.1} parent=1 // pred_fallthru
      _
    // Predicated region
    $region22: #{tpu_custom_call.1} parent=1 // pred_check
      _
    $region23: #{tpu_custom_call.1} parent=1 // pred_check_branch
      %53 = sbr.rel (0) target = $region25
    $region24: #{tpu_custom_call.1} parent=1 // pred_region
      %s55 = ssub.s32 2048, 2048
      %56 = vsyncadd [#allocation9], %s55
      %s57 = sshll.u32 [#allocation8], 4
      %s58 = int_to_ptr.vmem [resolvable:$true] %s57
      %63 = dma.hbm_to_vmem [thread:$0]  %s5, 2048, %s58, [#allocation9], 128, 128, 8
    $region25: #{tpu_custom_call.1} parent=1 // pred_fallthru
      _
    // Predicated region
    $region26: #{tpu_custom_call.1} parent=1 // pred_check
      _
    $region27: #{tpu_custom_call.1} parent=1 // pred_check_branch
      %65 = sbr.rel (0) target = $region29
    $region28: #{tpu_custom_call.1} parent=1 // pred_region
      _
    $region29: #{tpu_custom_call.1} parent=1 // pred_fallthru
      _
    // Predicated region
    $region30: #{tpu_custom_call.1} parent=1 // pred_check
      _
    $region31: #{tpu_custom_call.1} parent=1 // pred_check_branch
      %67 = sbr.rel (0) target = $region33
    $region32: #{tpu_custom_call.1} parent=1 // pred_region
      %68 = dma.done [#allocation3], 64
    $region33: #{tpu_custom_call.1} parent=1 // pred_fallthru
      _
    // Predicated region
    $region34: #{tpu_custom_call.1} parent=1 // pred_check
      _
    $region35: #{tpu_custom_call.1} parent=1 // pred_check_branch
      %70 = sbr.rel (0) target = $region37
    $region36: #{tpu_custom_call.1} parent=1 // pred_region
      %71 = dma.done [#allocation6], 64
    $region37: #{tpu_custom_call.1} parent=1 // pred_fallthru
      _
    // Predicated region
    $region38: #{tpu_custom_call.1} parent=1 // pred_check
      _
    $region39: #{tpu_custom_call.1} parent=1 // pred_check_branch
      %73 = sbr.rel (0) target = $region41
    $region40: #{tpu_custom_call.1} parent=1 // pred_region
      %74 = dma.done [#allocation6], 1024
    $region41: #{tpu_custom_call.1} parent=1 // pred_fallthru
      _
    // Predicated region
    $region42: #{tpu_custom_call.1} parent=1 // pred_check
      _
    $region43: #{tpu_custom_call.1} parent=1 // pred_check_branch
      %76 = sbr.rel (0) target = $region45
    $region44: #{tpu_custom_call.1} parent=1 // pred_region
      %77 = dma.done [#allocation9], 2048
    $region45: #{tpu_custom_call.1} parent=1 // pred_fallthru
      _
    %v79 = vld [vmem:[#allocation2] sm:$0xf]
    %v80 = vld [vmem:[#allocation5] sm:$0xf]
    %v81 = vld [vmem:[%s2] sm:$0x1]
    %v83 = vlaneseq
    %v84 = vshrl.u32 %v83, 7
    %v85 = vsub.s32 0, %v84
    %v86 = vrot.slane %v81, %v85
    %vm88 = vcmask 64512
    %v90 = vsel %vm88, %v79, 0
    %vm92 = vcmask 1043456
    %v94 = vsel %vm92, %v80, 0
    %96 = vmatprep.subr.bf16.mxu0 0
    %97 = vmatpush1.bf16.msra.mxu0 0
    %98 = vmatprep.subr.bf16.mxu0 0
    %99 = vmatpush1.bf16.msra.mxu0 0
    %100 = vmatprep.subr.bf16.mxu0 0
    %101 = vmatpush1.bf16.msra.mxu0 0
    %102 = vmatprep.subr.bf16.mxu0 0
    %103 = vmatpush1.bf16.msra.mxu0 0
    %104 = vmatprep.subr.bf16.mxu0 0
    %105 = vmatpush1.bf16.msra.mxu0 0
    %106 = vmatprep.subr.bf16.mxu0 0
    %107 = vmatpush1.bf16.msra.mxu0 0
    %108 = vmatprep.subr.bf16.mxu0 0
    %109 = vmatpush1.bf16.msra.mxu0 0
    %110 = vmatprep.subr.bf16.mxu0 0
    %111 = vmatpush1.bf16.msra.mxu0 %v94
    %112 = vmatprep.subr.bf16.mxu0 0
    %113 = vmatpush2.bf16.msra.mxu0 0
    %114 = vmatprep.subr.bf16.mxu0 0
    %115 = vmatpush2.bf16.msra.mxu0 0
    %116 = vmatprep.subr.bf16.mxu0 0
    %117 = vmatpush2.bf16.msra.mxu0 0
    %118 = vmatprep.subr.bf16.mxu0 0
    %119 = vmatpush2.bf16.msra.mxu0 0
    %120 = vmatprep.subr.bf16.mxu0 0
    %121 = vmatpush2.bf16.msra.mxu0 0
    %122 = vmatprep.subr.bf16.mxu0 0
    %123 = vmatpush2.bf16.msra.mxu0 0
    %124 = vmatprep.subr.bf16.mxu0 0
    %125 = vmatpush2.bf16.msra.mxu0 0
    %126 = vmatprep.subr.bf16.mxu0 0
    %127 = vmatpush2.bf16.msra.mxu0 0
    %128 = vmatprep.mubr.bf16.mxu0 0
    %129 = vmatmul.mubr.bf16.gmra.mxu0 %v90
    %v130 = vpop.f32.mrf.mxu0
    %v131 = vadd.f32 %v86, %v130
    %v132 = vpop.f32.mrf.mxu0
    %v133 = vpop.f32.mrf.mxu0
    %v134 = vpop.f32.mrf.mxu0
    %135 = vdwg.mxu0
    %v136 = vmax.f32 %v131, 0.0
    %v137 = vpack.c.bf16 %v136, %v136
    %v138 = vld [vmem:[#allocation7] sm:$0xf]
    %v139 = vld [vmem:[#allocation7 + $0x4] sm:$0xf]
    %v140 = vld [vmem:[#allocation7 + $0x8] sm:$0xf]
    %v141 = vld [vmem:[#allocation7 + $0xc] sm:$0xf]
    %v142 = vld [vmem:[#allocation7 + $0x10] sm:$0xf]
    %v143 = vld [vmem:[#allocation7 + $0x14] sm:$0xf]
    %v144 = vld [vmem:[#allocation7 + $0x18] sm:$0xf]
    %v145 = vld [vmem:[#allocation7 + $0x1c] sm:$0xf]
    %v146 = vld [vmem:[#allocation7 + $0x20] sm:$0xf]
    %v147 = vld [vmem:[#allocation7 + $0x24] sm:$0xf]
    %v148 = vld [vmem:[#allocation7 + $0x28] sm:$0xf]
    %v149 = vld [vmem:[#allocation7 + $0x2c] sm:$0xf]
    %v150 = vld [vmem:[#allocation7 + $0x30] sm:$0xf]
    %v151 = vld [vmem:[#allocation7 + $0x34] sm:$0xf]
    %v152 = vld [vmem:[#allocation7 + $0x38] sm:$0xf]
    %v153 = vld [vmem:[#allocation7 + $0x3c] sm:$0xf]
    %v154 = vld [vmem:[%s4] sm:$0x1]
    %v156 = vlaneseq
    %v157 = vshrl.u32 %v156, 7
    %v158 = vsub.s32 0, %v157
    %v159 = vrot.slane %v154, %v158
    %v177 = vunpack.c.l.b16 %v138
    %v178 = vunpack.c.l.b16 %v139
    %v179 = vunpack.c.l.b16 %v140
    %v180 = vunpack.c.l.b16 %v141
    %v181 = vunpack.c.l.b16 %v142
    %v182 = vunpack.c.l.b16 %v143
    %v183 = vunpack.c.l.b16 %v144
    %v184 = vunpack.c.l.b16 %v145
    %v185 = vunpack.c.l.b16 %v146
    %v186 = vunpack.c.l.b16 %v147
    %v187 = vunpack.c.l.b16 %v148
    %v188 = vunpack.c.l.b16 %v149
    %v189 = vunpack.c.l.b16 %v150
    %v190 = vunpack.c.l.b16 %v151
    %v191 = vunpack.c.l.b16 %v152
    %v192 = vunpack.c.l.b16 %v153
    %v193 = vpack.c.b16 %v178, %v177
    %v194 = vpack.c.b16 %v180, %v179
    %v195 = vpack.c.b16 %v182, %v181
    %v196 = vpack.c.b16 %v184, %v183
    %v197 = vpack.c.b16 %v186, %v185
    %v198 = vpack.c.b16 %v188, %v187
    %v199 = vpack.c.b16 %v190, %v189
    %v200 = vpack.c.b16 %v192, %v191
    %209 = vmatprep.subr.bf16.mxu0 0
    %210 = vmatpush1.bf16.msra.mxu0 %v200
    %211 = vmatprep.subr.bf16.mxu0 0
    %212 = vmatpush1.bf16.msra.mxu0 %v199
    %213 = vmatprep.subr.bf16.mxu0 0
    %214 = vmatpush1.bf16.msra.mxu0 %v198
    %215 = vmatprep.subr.bf16.mxu0 0
    %216 = vmatpush1.bf16.msra.mxu0 %v197
    %217 = vmatprep.subr.bf16.mxu0 0
    %218 = vmatpush1.bf16.msra.mxu0 %v196
    %219 = vmatprep.subr.bf16.mxu0 0
    %220 = vmatpush1.bf16.msra.mxu0 %v195
    %221 = vmatprep.subr.bf16.mxu0 0
    %222 = vmatpush1.bf16.msra.mxu0 %v194
    %223 = vmatprep.subr.bf16.mxu0 0
    %224 = vmatpush1.bf16.msra.mxu0 %v193
    %225 = vmatprep.subr.bf16.mxu0 0
    %226 = vmatpush2.bf16.msra.mxu0 0
    %227 = vmatprep.subr.bf16.mxu0 0
    %228 = vmatpush2.bf16.msra.mxu0 0
    %229 = vmatprep.subr.bf16.mxu0 0
    %230 = vmatpush2.bf16.msra.mxu0 0
    %231 = vmatprep.subr.bf16.mxu0 0
    %232 = vmatpush2.bf16.msra.mxu0 0
    %233 = vmatprep.subr.bf16.mxu0 0
    %234 = vmatpush2.bf16.msra.mxu0 0
    %235 = vmatprep.subr.bf16.mxu0 0
    %236 = vmatpush2.bf16.msra.mxu0 0
    %237 = vmatprep.subr.bf16.mxu0 0
    %238 = vmatpush2.bf16.msra.mxu0 0
    %239 = vmatprep.subr.bf16.mxu0 0
    %240 = vmatpush2.bf16.msra.mxu0 0
    %241 = vmatprep.mubr.bf16.mxu0 0
    %242 = vmatmul.mubr.bf16.gmra.mxu0 %v137
    %v243 = vpop.f32.mrf.mxu0
    %v244 = vadd.f32 %v159, %v243
    %v245 = vpop.f32.mrf.mxu0
    %v246 = vpop.f32.mrf.mxu0
    %v247 = vpop.f32.mrf.mxu0
    %248 = vdwg.mxu0
    %v249 = vpack.c.bf16 %v244, %v244
    %v250 = vld [vmem:[#allocation8] sm:$0xff]
    %v251 = vld [vmem:[#allocation8 + $0x8] sm:$0xff]
    %v252 = vld [vmem:[#allocation8 + $0x10] sm:$0xff]
    %v253 = vld [vmem:[#allocation8 + $0x18] sm:$0xff]
    %v254 = vld [vmem:[#allocation8 + $0x20] sm:$0xff]
    %v255 = vld [vmem:[#allocation8 + $0x28] sm:$0xff]
    %v256 = vld [vmem:[#allocation8 + $0x30] sm:$0xff]
    %v257 = vld [vmem:[#allocation8 + $0x38] sm:$0xff]
    %v258 = vld [vmem:[#allocation8 + $0x40] sm:$0xff]
    %v259 = vld [vmem:[#allocation8 + $0x48] sm:$0xff]
    %v260 = vld [vmem:[#allocation8 + $0x50] sm:$0xff]
    %v261 = vld [vmem:[#allocation8 + $0x58] sm:$0xff]
    %v262 = vld [vmem:[#allocation8 + $0x60] sm:$0xff]
    %v263 = vld [vmem:[#allocation8 + $0x68] sm:$0xff]
    %v264 = vld [vmem:[#allocation8 + $0x70] sm:$0xff]
    %v265 = vld [vmem:[#allocation8 + $0x78] sm:$0xff]
    %v266 = vld [vmem:[%s6] sm:$0x3]
    %v268 = vlaneseq
    %v269 = vshrl.u32 %v268, 7
    %v270 = vsub.s32 0, %v269
    %v271 = vrot.slane %v266, %v270
    %v272 = vlaneseq
    %v273 = vshrl.u32 %v272, 7
    %v274 = vsub.s32 1, %v273
    %v275 = vrot.slane %v266, %v274
    %v294 = vunpack.c.l.b16 %v250
    %v295 = vunpack.c.h.b16 %v250
    %v296 = vunpack.c.l.b16 %v251
    %v297 = vunpack.c.h.b16 %v251
    %v298 = vunpack.c.l.b16 %v252
    %v299 = vunpack.c.h.b16 %v252
    %v300 = vunpack.c.l.b16 %v253
    %v301 = vunpack.c.h.b16 %v253
    %v302 = vunpack.c.l.b16 %v254
    %v303 = vunpack.c.h.b16 %v254
    %v304 = vunpack.c.l.b16 %v255
    %v305 = vunpack.c.h.b16 %v255
    %v306 = vunpack.c.l.b16 %v256
    %v307 = vunpack.c.h.b16 %v256
    %v308 = vunpack.c.l.b16 %v257
    %v309 = vunpack.c.h.b16 %v257
    %v310 = vunpack.c.l.b16 %v258
    %v311 = vunpack.c.h.b16 %v258
    %v312 = vunpack.c.l.b16 %v259
    %v313 = vunpack.c.h.b16 %v259
    %v314 = vunpack.c.l.b16 %v260
    %v315 = vunpack.c.h.b16 %v260
    %v316 = vunpack.c.l.b16 %v261
    %v317 = vunpack.c.h.b16 %v261
    %v318 = vunpack.c.l.b16 %v262
    %v319 = vunpack.c.h.b16 %v262
    %v320 = vunpack.c.l.b16 %v263
    %v321 = vunpack.c.h.b16 %v263
    %v322 = vunpack.c.l.b16 %v264
    %v323 = vunpack.c.h.b16 %v264
    %v324 = vunpack.c.l.b16 %v265
    %v325 = vunpack.c.h.b16 %v265
    %v326 = vpack.c.b16 %v296, %v294
    %v327 = vpack.c.b16 %v297, %v295
    %v328 = vpack.c.b16 %v300, %v298
    %v329 = vpack.c.b16 %v301, %v299
    %v330 = vpack.c.b16 %v304, %v302
    %v331 = vpack.c.b16 %v305, %v303
    %v332 = vpack.c.b16 %v308, %v306
    %v333 = vpack.c.b16 %v309, %v307
    %v334 = vpack.c.b16 %v312, %v310
    %v335 = vpack.c.b16 %v313, %v311
    %v336 = vpack.c.b16 %v316, %v314
    %v337 = vpack.c.b16 %v317, %v315
    %v338 = vpack.c.b16 %v320, %v318
    %v339 = vpack.c.b16 %v321, %v319
    %v340 = vpack.c.b16 %v324, %v322
    %v341 = vpack.c.b16 %v325, %v323
    %358 = vmatprep.subr.bf16.mxu0 %v341
    %359 = vmatpush1.bf16.msra.mxu0 %v340
    %360 = vmatprep.subr.bf16.mxu0 %v339
    %361 = vmatpush1.bf16.msra.mxu0 %v338
    %362 = vmatprep.subr.bf16.mxu0 %v337
    %363 = vmatpush1.bf16.msra.mxu0 %v336
    %364 = vmatprep.subr.bf16.mxu0 %v335
    %365 = vmatpush1.bf16.msra.mxu0 %v334
    %366 = vmatprep.subr.bf16.mxu0 %v333
    %367 = vmatpush1.bf16.msra.mxu0 %v332
    %368 = vmatprep.subr.bf16.mxu0 %v331
    %369 = vmatpush1.bf16.msra.mxu0 %v330
    %370 = vmatprep.subr.bf16.mxu0 %v329
    %371 = vmatpush1.bf16.msra.mxu0 %v328
    %372 = vmatprep.subr.bf16.mxu0 %v327
    %373 = vmatpush1.bf16.msra.mxu0 %v326
    %374 = vmatprep.subr.bf16.mxu0 0
    %375 = vmatpush2.bf16.msra.mxu0 0
    %376 = vmatprep.subr.bf16.mxu0 0
    %377 = vmatpush2.bf16.msra.mxu0 0
    %378 = vmatprep.subr.bf16.mxu0 0
    %379 = vmatpush2.bf16.msra.mxu0 0
    %380 = vmatprep.subr.bf16.mxu0 0
    %381 = vmatpush2.bf16.msra.mxu0 0
    %382 = vmatprep.subr.bf16.mxu0 0
    %383 = vmatpush2.bf16.msra.mxu0 0
    %384 = vmatprep.subr.bf16.mxu0 0
    %385 = vmatpush2.bf16.msra.mxu0 0
    %386 = vmatprep.subr.bf16.mxu0 0
    %387 = vmatpush2.bf16.msra.mxu0 0
    %388 = vmatprep.subr.bf16.mxu0 0
    %389 = vmatpush2.bf16.msra.mxu0 0
    %390 = vmatprep.mubr.bf16.mxu0 0
    %391 = vmatmul.mubr.bf16.gmra.mxu0 %v249
    %v392 = vpop.f32.mrf.mxu0
    %v393 = vadd.f32 %v271, %v392
    %v394 = vpop.f32.mrf.mxu0
    %v395 = vadd.f32 %v275, %v394
    %v396 = vpop.f32.mrf.mxu0
    %v397 = vpop.f32.mrf.mxu0
    %398 = vdwg.mxu0
    %v399 = vsub.f32 0.0, %v393
    %v400 = vsub.f32 0.0, %v395
    %v401 = vmul.f32 %v399, 1.442695
    %v402 = vpow.pop %v401
    %v403 = vmul.f32 %v400, 1.442695
    %v404 = vpow.pop %v403
    %v405 = vadd.f32 %v402, 1.0
    %v406 = vadd.f32 %v404, 1.0
    %v407 = vrcp.pop %v405
    %v408 = vrcp.pop %v406
    %409 = vst [vmem:[#allocation10] sm:$0xff] %v407
    %410 = vst [vmem:[#allocation10 + $0x8] sm:$0xff] %v408
    // Predicated region
    $region46: #{tpu_custom_call.1} parent=1 // pred_check
      _
    $region47: #{tpu_custom_call.1} parent=1 // pred_check_branch
      %412 = sbr.rel (0) target = $region49
    $region48: #{tpu_custom_call.1} parent=1 // pred_region
      %s414 = ssub.s32 256, 256
      %415 = vsyncadd [#allocation4], %s414
      %s417 = sshll.u32 [#allocation10], 4
      %s418 = int_to_ptr.vmem [resolvable:$true] %s417
      %420 = dma.vmem_to_hbm [thread:$0]  %s418, 256, %s7, [#allocation4]
    $region49: #{tpu_custom_call.1} parent=1 // pred_fallthru
      _
    // Predicated region
    $region50: #{tpu_custom_call.1} parent=1 // pred_check
      _
    $region51: #{tpu_custom_call.1} parent=1 // pred_check_branch
      %422 = sbr.rel (0) target = $region53
    $region52: #{tpu_custom_call.1} parent=1 // pred_region
      %423 = dma.done [#allocation4], 256
    $region53: #{tpu_custom_call.1} parent=1 // pred_fallthru
      _
    %424 = vsyncpa [#allocation3], 1
    %425 = vsyncpa [#allocation6], 1
    %426 = vsyncpa [#allocation9], 1
    %427 = vsyncpa [#allocation4], 1

</llo_original>
